<compile_context>
chip_gen: v5e
topology: v5e:2x2
jax: 0.10.0
libtpu: 0.0.40
codegen_flags: <defaults>
</compile_context>

<pallas_src>
import functools

import jax
import jax.numpy as jnp
from jax.experimental import pallas as pl
from jax.experimental.pallas import tpu as pltpu


def _pair(v):
    return (v, v) if isinstance(v, int) else tuple(v)


def _round_up(x, m):
    return ((x + m - 1) // m) * m


def _padded_bytes(shape, dtype):
    """VMEM bytes of a block after Mosaic (sublane, lane) tile padding."""
    itemsize = jnp.dtype(dtype).itemsize
    sub = 8 * max(1, 4 // itemsize)          # f32: 8, bf16: 16, int8: 32
    dims = list(shape)
    dims[-1] = _round_up(dims[-1], 128)
    if len(dims) >= 2:
        dims[-2] = _round_up(dims[-2], sub)
    n = 1
    for d in dims:
        n *= d
    return n * itemsize


def _pick_m_tile(HO, WO, target_m=256):
    """Largest HO-divisor tile keeping the (tile*WO, Op) accumulator <=~128 KiB
    and the flattened M block sublane-aligned (multiple of 8) or the full dim."""
    if HO * WO <= target_m:
        return HO
    cands = [t for t in range(1, HO + 1)
             if HO % t == 0 and t * WO <= target_m and (t * WO) % 8 == 0]
    return max(cands) if cands else HO


def _conv_kernel(x_ref, w_ref, o_ref, *, KH, KW, sh, sw, tHO, WO, C):
    """One (image, M-tile) grid step.

    x_ref: (1, sh*sw, Hq, Wq, C)  phase-planar zero-padded image (resident per n)
    w_ref: (KH*KW*C, Op)          taps folded into the GEMM contraction dim
    o_ref: (1, tHO*WO, Op)        lane-dense output tile
    """
    t = pl.program_id(1)
    h0 = t * tHO                                  # first output row of this tile
    taps = []
    for kh in range(KH):                          # static, fully unrolled
        for kw in range(KW):
            phase = (kh % sh) * sw + (kw % sw)
            qh, qw = kh // sh, kw // sw
            # contiguous window: rows [h0+qh, h0+qh+tHO), cols [qw, qw+WO)
            taps.append(x_ref[0, phase, pl.ds(h0 + qh, tHO), pl.ds(qw, WO), :])
    patches = jnp.concatenate(taps, axis=-1)              # (tHO, WO, KH*KW*C)
    patches = patches.reshape(tHO * WO, KH * KW * C)      # one relayout, one GEMM
    acc = jnp.dot(patches, w_ref[...], preferred_element_type=jnp.float32)
    o_ref[0] = acc.astype(o_ref.dtype)


@functools.partial(jax.jit, static_argnames=("stride", "padding", "compute_dtype"))
def conv2d_pallas(x, weight, *, stride, padding, compute_dtype=None):
    """F.conv2d(x, weight, stride=stride, padding=padding); x NCHW, weight OIHW."""
    sh, sw = _pair(stride)
    ph, pw = _pair(padding)
    N, C, H, W = x.shape
    O, Cw, KH, KW = weight.shape
    assert Cw == C, "grouped conv not supported"

    HO = (H + 2 * ph - KH) // sh + 1
    WO = (W + 2 * pw - KW) // sw + 1
    assert HO > 0 and WO > 0

    LANE = 128
    Op = _round_up(O, LANE)              # lane-dense output channels
    K = KH * KW * C                      # folded GEMM contraction depth
    M = HO * WO

    # ---- wrapper glue: one pad + one phase-planar relayout pass over x ----
    # x_ph[n, ph*sw+pw, r, q, c] = x_pad[n, r*sh + ph, q*sw + pw, c]
    Hq = (KH - 1) // sh + HO
    Wq = (KW - 1) // sw + WO
    Hp2, Wp2 = Hq * sh, Wq * sw
    x_nhwc = jnp.transpose(x, (0, 2, 3, 1))
    x_p = jnp.pad(x_nhwc, ((0, 0),
                           (ph, max(Hp2 - H - ph, 0)),
                           (pw, max(Wp2 - W - pw, 0)),
                           (0, 0)))[:, :Hp2, :Wp2, :]
    x_ph = (x_p.reshape(N, Hq, sh, Wq, sw, C)
               .transpose(0, 2, 4, 1, 3, 5)
               .reshape(N, sh * sw, Hq, Wq, C))

    w2 = jnp.transpose(weight, (2, 3, 1, 0)).reshape(K, O)   # (kh,kw,c) major
    if Op != O:
        w2 = jnp.pad(w2, ((0, 0), (0, Op - O)))

    if compute_dtype is not None:        # optional bf16 MXU inputs, f32 accumulate
        x_ph = x_ph.astype(compute_dtype)
        w2 = w2.astype(compute_dtype)
    cdt = x_ph.dtype

    tHO = _pick_m_tile(HO, WO)
    tM = tHO * WO
    MT = HO // tHO

    kernel = functools.partial(_conv_kernel, KH=KH, KW=KW, sh=sh, sw=sw,
                               tHO=tHO, WO=WO, C=C)

    c_item = jnp.dtype(cdt).itemsize
    o_item = jnp.dtype(x.dtype).itemsize
    cost = pl.CostEstimate(
        flops=2 * N * M * K * O,
        transcendentals=0,
        bytes_accessed=x_ph.size * c_item + w2.size * c_item + N * M * Op * o_item,
    )

    # ---- VMEM budget with (sublane, lane)-padding-aware block sizes ----
    xblk = _padded_bytes((sh * sw, Hq, Wq, C), cdt)
    wblk = _padded_bytes((K, Op), cdt)
    oblk = _padded_bytes((tM, Op), x.dtype)
    work = _padded_bytes((tM, K), jnp.float32) + _padded_bytes((tM, Op), jnp.float32)
    need = 2 * (xblk + oblk + wblk) + work + (4 << 20)
    try:
        vmem_cap = int(pltpu.get_tpu_info().vmem_capacity_bytes)
    except Exception:
        vmem_cap = 64 << 20              # conservative (v7x per-core VMEM)
    vmem_limit = int(min(max(need, 16 << 20), (vmem_cap * 7) // 8))
    # TODO(synk): for images whose resident phase-planar block exceeds this
    # budget, switch the input to memory_space=pl.ANY with manual halo-row
    # double-buffered DMA; also single-buffer the constant weight block
    # (pl.Buffered(1)) once buffer_count=1 support is confirmed.

    out = pl.pallas_call(
        kernel,
        out_shape=jax.ShapeDtypeStruct((N, M, Op), x.dtype),
        grid_spec=pltpu.PrefetchScalarGridSpec(
            num_scalar_prefetch=0,
            grid=(N, MT),                # MT inner => image block never re-DMAed
            in_specs=[
                pl.BlockSpec((1, sh * sw, Hq, Wq, C),
                             lambda n, t: (n, 0, 0, 0, 0)),
                pl.BlockSpec((K, Op), lambda n, t: (0, 0)),
            ],
            out_specs=pl.BlockSpec((1, tM, Op), lambda n, t: (n, t, 0)),
        ),
        compiler_params=pltpu.CompilerParams(
            dimension_semantics=("parallel", "parallel"),
            vmem_limit_bytes=vmem_limit,
        ),
        cost_estimate=cost,
    )(x_ph, w2)

    # ---- glue: strip channel padding, back to NCHW (PyTorch layout) ----
    out = out[:, :, :O].reshape(N, HO, WO, O)
    return jnp.transpose(out, (0, 3, 1, 2))


if __name__ == "__main__":
    # ConvOp(stride=2, padding=1)
    stride, padding = 2, 1

    key = jax.random.PRNGKey(0)
    kx, kw = jax.random.split(key)
    N, C, H, W = 2, 4, 16, 16
    O, KH, KW = 8, 3, 3
    x = jax.random.normal(kx, (N, C, H, W), dtype=jnp.float32)
    weight = jax.random.normal(kw, (O, C, KH, KW), dtype=jnp.float32)

    out = conv2d_pallas(x, weight, stride=stride, padding=padding)
    out = jax.block_until_ready(out)

    # correctness check against XLA's conv (same semantics as F.conv2d)
    ref = jax.lax.conv_general_dilated(
        x, weight,
        window_strides=(stride, stride),
        padding=[(padding, padding), (padding, padding)],
        dimension_numbers=("NCHW", "OIHW", "NCHW"),
        precision=jax.lax.Precision.HIGHEST,
    )
    assert out.shape == ref.shape, (out.shape, ref.shape)
    err = float(jnp.max(jnp.abs(out - ref)))
    assert err < 5e-2, err
    print("KERNEL_OK")
</pallas_src>

<mosaic_0001>
module attributes {stable_mosaic.version = 11 : i64} {
  func.func @_conv_kernel(%arg0: i32, %arg1: i32, %arg2: memref<1x4x9x9x4xf32, #tpu.memory_space<vmem>>, %arg3: memref<36x128xf32, #tpu.memory_space<vmem>>, %arg4: memref<1x64x128xf32, #tpu.memory_space<vmem>>) attributes {dimension_semantics = [#tpu.dimension_semantics<parallel>, #tpu.dimension_semantics<parallel>], iteration_bounds = array<i64: 2, 1>, scalar_prefetch = 0 : i64, scratch_operands = 0 : i64, tpu.core_type = #tpu.core_type<tc>, window_params = [{transform_indices = @transform_0, window_bounds = array<i64: 1, 4, 9, 9, 4>}, {pipeline_mode = #tpu.pipeline_mode<synchronous>, transform_indices = @transform_1, window_bounds = array<i64: 36, 128>}, {transform_indices = @transform_2, window_bounds = array<i64: 1, 64, 128>}]} {
    %c8_i32 = arith.constant 8 : i32
    %0 = arith.muli %arg1, %c8_i32 : i32
    %c0_i32 = arith.constant 0 : i32
    %1 = arith.addi %0, %c0_i32 : i32
    %c0 = arith.constant 0 : index
    %c0_0 = arith.constant 0 : index
    %2 = arith.index_cast %1 : i32 to index
    %c0_1 = arith.constant 0 : index
    %c0_2 = arith.constant 0 : index
    %3 = vector.load %arg2[%c0, %c0_0, %2, %c0_1, %c0_2] : memref<1x4x9x9x4xf32, #tpu.memory_space<vmem>>, vector<1x1x8x8x4xf32>
    %4 = vector.shape_cast %3 : vector<1x1x8x8x4xf32> to vector<8x8x4xf32>
    %c0_i32_3 = arith.constant 0 : i32
    %5 = arith.addi %0, %c0_i32_3 : i32
    %c0_4 = arith.constant 0 : index
    %c1 = arith.constant 1 : index
    %6 = arith.index_cast %5 : i32 to index
    %c0_5 = arith.constant 0 : index
    %c0_6 = arith.constant 0 : index
    %7 = vector.load %arg2[%c0_4, %c1, %6, %c0_5, %c0_6] : memref<1x4x9x9x4xf32, #tpu.memory_space<vmem>>, vector<1x1x8x8x4xf32>
    %8 = vector.shape_cast %7 : vector<1x1x8x8x4xf32> to vector<8x8x4xf32>
    %c0_i32_7 = arith.constant 0 : i32
    %9 = arith.addi %0, %c0_i32_7 : i32
    %c0_8 = arith.constant 0 : index
    %c0_9 = arith.constant 0 : index
    %10 = arith.index_cast %9 : i32 to index
    %c1_10 = arith.constant 1 : index
    %c0_11 = arith.constant 0 : index
    %11 = vector.load %arg2[%c0_8, %c0_9, %10, %c1_10, %c0_11] : memref<1x4x9x9x4xf32, #tpu.memory_space<vmem>>, vector<1x1x8x8x4xf32>
    %12 = vector.shape_cast %11 : vector<1x1x8x8x4xf32> to vector<8x8x4xf32>
    %c0_i32_12 = arith.constant 0 : i32
    %13 = arith.addi %0, %c0_i32_12 : i32
    %c0_13 = arith.constant 0 : index
    %c2 = arith.constant 2 : index
    %14 = arith.index_cast %13 : i32 to index
    %c0_14 = arith.constant 0 : index
    %c0_15 = arith.constant 0 : index
    %15 = vector.load %arg2[%c0_13, %c2, %14, %c0_14, %c0_15] : memref<1x4x9x9x4xf32, #tpu.memory_space<vmem>>, vector<1x1x8x8x4xf32>
    %16 = vector.shape_cast %15 : vector<1x1x8x8x4xf32> to vector<8x8x4xf32>
    %c0_i32_16 = arith.constant 0 : i32
    %17 = arith.addi %0, %c0_i32_16 : i32
    %c0_17 = arith.constant 0 : index
    %c3 = arith.constant 3 : index
    %18 = arith.index_cast %17 : i32 to index
    %c0_18 = arith.constant 0 : index
    %c0_19 = arith.constant 0 : index
    %19 = vector.load %arg2[%c0_17, %c3, %18, %c0_18, %c0_19] : memref<1x4x9x9x4xf32, #tpu.memory_space<vmem>>, vector<1x1x8x8x4xf32>
    %20 = vector.shape_cast %19 : vector<1x1x8x8x4xf32> to vector<8x8x4xf32>
    %c0_i32_20 = arith.constant 0 : i32
    %21 = arith.addi %0, %c0_i32_20 : i32
    %c0_21 = arith.constant 0 : index
    %c2_22 = arith.constant 2 : index
    %22 = arith.index_cast %21 : i32 to index
    %c1_23 = arith.constant 1 : index
    %c0_24 = arith.constant 0 : index
    %23 = vector.load %arg2[%c0_21, %c2_22, %22, %c1_23, %c0_24] : memref<1x4x9x9x4xf32, #tpu.memory_space<vmem>>, vector<1x1x8x8x4xf32>
    %24 = vector.shape_cast %23 : vector<1x1x8x8x4xf32> to vector<8x8x4xf32>
    %c1_i32 = arith.constant 1 : i32
    %25 = arith.addi %0, %c1_i32 : i32
    %c0_25 = arith.constant 0 : index
    %c0_26 = arith.constant 0 : index
    %26 = arith.index_cast %25 : i32 to index
    %c0_27 = arith.constant 0 : index
    %c0_28 = arith.constant 0 : index
    %27 = vector.load %arg2[%c0_25, %c0_26, %26, %c0_27, %c0_28] : memref<1x4x9x9x4xf32, #tpu.memory_space<vmem>>, vector<1x1x8x8x4xf32>
    %28 = vector.shape_cast %27 : vector<1x1x8x8x4xf32> to vector<8x8x4xf32>
    %c1_i32_29 = arith.constant 1 : i32
    %29 = arith.addi %0, %c1_i32_29 : i32
    %c0_30 = arith.constant 0 : index
    %c1_31 = arith.constant 1 : index
    %30 = arith.index_cast %29 : i32 to index
    %c0_32 = arith.constant 0 : index
    %c0_33 = arith.constant 0 : index
    %31 = vector.load %arg2[%c0_30, %c1_31, %30, %c0_32, %c0_33] : memref<1x4x9x9x4xf32, #tpu.memory_space<vmem>>, vector<1x1x8x8x4xf32>
    %32 = vector.shape_cast %31 : vector<1x1x8x8x4xf32> to vector<8x8x4xf32>
    %c1_i32_34 = arith.constant 1 : i32
    %33 = arith.addi %0, %c1_i32_34 : i32
    %c0_35 = arith.constant 0 : index
    %c0_36 = arith.constant 0 : index
    %34 = arith.index_cast %33 : i32 to index
    %c1_37 = arith.constant 1 : index
    %c0_38 = arith.constant 0 : index
    %35 = vector.load %arg2[%c0_35, %c0_36, %34, %c1_37, %c0_38] : memref<1x4x9x9x4xf32, #tpu.memory_space<vmem>>, vector<1x1x8x8x4xf32>
    %36 = vector.shape_cast %35 : vector<1x1x8x8x4xf32> to vector<8x8x4xf32>
    %37 = tpu.concatenate %4, %8, %12, %16, %20, %24, %28, %32, %36 in 2 : vector<8x8x4xf32>, vector<8x8x4xf32>, vector<8x8x4xf32>, vector<8x8x4xf32>, vector<8x8x4xf32>, vector<8x8x4xf32>, vector<8x8x4xf32>, vector<8x8x4xf32>, vector<8x8x4xf32> -> vector<8x8x36xf32>
    %38 = vector.shape_cast %37 : vector<8x8x36xf32> to vector<64x36xf32>
    %c0_39 = arith.constant 0 : index
    %c0_40 = arith.constant 0 : index
    %39 = vector.load %arg3[%c0_39, %c0_40] : memref<36x128xf32, #tpu.memory_space<vmem>>, vector<36x128xf32>
    %cst = arith.constant dense<0.000000e+00> : vector<64x128xf32>
    %40 = tpu.matmul %38, %39, %cst {dimension_numbers = #tpu.dot_dimension_numbers<[1], [0], [0], [1], [0, 0, 1, 1], [], []>} : vector<64x36xf32>, vector<36x128xf32>, vector<64x128xf32> -> vector<64x128xf32>
    %c0_41 = arith.constant 0 : index
    %c0_42 = arith.constant 0 : index
    %c0_43 = arith.constant 0 : index
    %41 = vector.load %arg4[%c0_41, %c0_42, %c0_43] : memref<1x64x128xf32, #tpu.memory_space<vmem>>, vector<1x64x128xf32>
    %42 = vector.shape_cast %41 : vector<1x64x128xf32> to vector<64x128xf32>
    %43 = vector.shape_cast %40 : vector<64x128xf32> to vector<1x64x128xf32>
    tpu.vector_store %arg4[%c0_41, %c0_42, %c0_43], %43 {strides = array<i32>} : memref<1x64x128xf32, #tpu.memory_space<vmem>>, vector<1x64x128xf32>,
    return
  }
  func.func @transform_0(%arg0: i32, %arg1: i32) -> (i32, i32, i32, i32, i32) {
    %c0_i32 = arith.constant 0 : i32
    %c0_i32_0 = arith.constant 0 : i32
    %c0_i32_1 = arith.constant 0 : i32
    %c0_i32_2 = arith.constant 0 : i32
    %c0_i32_3 = arith.constant 0 : i32
    return %arg0, %c0_i32, %c0_i32_0, %c0_i32_1, %c0_i32_2 : i32, i32, i32, i32, i32
  }
  func.func @transform_1(%arg0: i32, %arg1: i32) -> (i32, i32) {
    %c0_i32 = arith.constant 0 : i32
    %c0_i32_0 = arith.constant 0 : i32
    %c0_i32_1 = arith.constant 0 : i32
    return %c0_i32, %c0_i32_0 : i32, i32
  }
  func.func @transform_2(%arg0: i32, %arg1: i32) -> (i32, i32, i32) {
    %c0_i32 = arith.constant 0 : i32
    %c0_i32_0 = arith.constant 0 : i32
    return %arg0, %arg1, %c0_i32 : i32, i32, i32
  }
}

</mosaic_0001>

<llo_original>
// kernel: conv2d_pallas.1
$region0: #{conv2d_pallas.1}
  #allocation0 [shape = 'u32[]', space=smem, size = 0x4, offset = 0x4, fixed_abs, tag = 'smem constant byte address 0x4 - core index']
  #allocation1 [shape = 'u32[72,128]{1,0:T(1,128)}', space=vmem, size = 0x9000, scoped, tag = 'internal scratch']
  %s0 = inlined_call_operand.vmem [shape: f32[2,4,9,9,4], index: 0, kind: input, shape index: {}]
  %s1 = inlined_call_operand.vmem [shape: f32[36,128], index: 1, kind: input, shape index: {}]
  %s2 = inlined_call_operand.vmem [shape: f32[2,64,128], index: 2, kind: output, shape index: {}]
  %s3 = sld [smem:[#allocation0]]
  $region41: #{conv2d_pallas.1} parent=0
    _
  %s5 = ssub.s32 1, %s3
  %s6 = scalar_select 0, %s5, %s3
  loop: start=0, step=1, limit=4
  $region2: #{conv2d_pallas.1} parent=0 // loop_pre_header
    _
  $region3: #{conv2d_pallas.1} parent=0 // loop_header
    %s8 = sphi 0, %s12
    %p9 = scmp.ge.s32.totalorder %s8, 4
    %s15 = sphi 0, %s27
    %s16 = sphi 0, %s23
    %s17 = sphi 0, %s15
    %s18 = sphi 0, %s16
    %s19 = sphi 0, %s17
    %s20 = sphi 0, %s18
    %s30 = sphi 0, %s32
    %s33 = sphi 0, %s30
    %s34 = sphi 0, %s33
    %s50 = sphi 0, %s34
    %s54 = sphi 0, %s54
    %s56 = sphi 0, %s54
    %s57 = sphi 0, %s56
    %s71 = sphi 0, %s57
    %s79 = sphi 0, %s81
    %s82 = sphi 0, %s79
    %s83 = sphi 0, %s82
    %s99 = sphi 0, %s83
  $region4: #{conv2d_pallas.1} parent=0 // loop_header_branch
    %11 = sbr.rel (%p9) target = $region8
  $region5: #{conv2d_pallas.1} parent=0 // loop_body
    %s13 = ssub.s32 %s8, 1
    %s14 = ssub.s32 %s8, 2
    %s21 = sadd.s32 1, %s16
    %p22 = scmp.ge.s32.totalorder %s21, 1
    %s23 = scalar_select %p22, 0, %s21
    %s24 = sadd.s32 1, %s15
    %s25 = scalar_select %p22, %s24, %s15
    %p26 = scmp.ge.s32.totalorder %s25, 2
    %s27 = scalar_select %p26, 0, %s25
    %s28 = ssub.s32 %s15, %s27
    %p29 = scmp.eq.s32.totalorder %s28, 0
    %s31 = sadd.s32 %s30, 1
    %s32 = scalar_select %p29, %s30, %s31
    %p35 = pneg %p29
    %p36 = scmp.eq.s32.totalorder %s8, 1
    %p37 = por %p35, %p36
    %p38 = scmp.ne.s32.totalorder %s30, %s33
    %p39 = scmp.eq.s32.totalorder %s8, 0
    %p40 = por %p38, %p39
    %p41 = scmp.ne.s32.totalorder %s30, %s33
    %p42 = scmp.eq.s32.totalorder %s13, 1
    %p43 = por %p41, %p42
    %p44 = scmp.ne.s32.totalorder %s33, %s34
    %p45 = scmp.eq.s32.totalorder %s13, 0
    %p46 = por %p44, %p45
    %p47 = scmp.ne.s32.totalorder %s33, %s34
    %p48 = scmp.eq.s32.totalorder %s14, 1
    %p49 = por %p47, %p48
    %p51 = scmp.ne.s32.totalorder %s34, %s50
    %p52 = scmp.eq.s32.totalorder %s14, 0
    %p53 = por %p51, %p52
    %s55 = sadd.s32 %s54, 1
    %p58 = scmp.eq.s32.totalorder %s8, 1
    %p59 = scmp.ne.s32.totalorder %s54, %s56
    %p60 = scmp.eq.s32.totalorder %s8, 0
    %p61 = por %p59, %p60
    %p62 = scmp.ne.s32.totalorder %s54, %s56
    %p63 = scmp.eq.s32.totalorder %s13, 1
    %p64 = por %p62, %p63
    %p65 = scmp.ne.s32.totalorder %s56, %s57
    %p66 = scmp.eq.s32.totalorder %s13, 0
    %p67 = por %p65, %p66
    %p68 = scmp.ne.s32.totalorder %s56, %s57
    %p69 = scmp.eq.s32.totalorder %s14, 1
    %p70 = por %p68, %p69
    %p72 = scmp.ne.s32.totalorder %s57, %s71
    %p73 = scmp.eq.s32.totalorder %s14, 0
    %p74 = por %p72, %p73
    %s75 = ssub.s32 %s15, %s27
    %s76 = ssub.s32 %s16, %s23
    %s77 = sor.u32 %s75, %s76
    %p78 = scmp.eq.s32.totalorder %s77, 0
    %s80 = sadd.s32 %s79, 1
    %s81 = scalar_select %p78, %s79, %s80
    %p84 = pneg %p78
    %p85 = scmp.eq.s32.totalorder %s8, 1
    %p86 = por %p84, %p85
    %p87 = scmp.ne.s32.totalorder %s79, %s82
    %p88 = scmp.eq.s32.totalorder %s8, 0
    %p89 = por %p87, %p88
    %p90 = scmp.ne.s32.totalorder %s79, %s82
    %p91 = scmp.eq.s32.totalorder %s13, 1
    %p92 = por %p90, %p91
    %p93 = scmp.ne.s32.totalorder %s82, %s83
    %p94 = scmp.eq.s32.totalorder %s13, 0
    %p95 = por %p93, %p94
    %p96 = scmp.ne.s32.totalorder %s82, %s83
    %p97 = scmp.eq.s32.totalorder %s14, 1
    %p98 = por %p96, %p97
    %p100 = scmp.ne.s32.totalorder %s83, %s99
    %p101 = scmp.eq.s32.totalorder %s14, 0
    %p102 = por %p100, %p101
    %p103 = scmp.le.s32.totalorder 1, %s8
    %p104 = scmp.lt.s32.totalorder %s8, 3
    %p105 = pnand %p103, %p104
    %p106 = pneg %p105
    // Predicated region
    $region9: #{conv2d_pallas.1} parent=5 // pred_check
      _
    $region10: #{conv2d_pallas.1} parent=5 // pred_check_branch
      %108 = sbr.rel (%p105) target = $region12
    $region11: #{conv2d_pallas.1} parent=5 // pred_region
      %s109 = ssub.s32 %s8, 1
      // Predicated region
      $region13: #{conv2d_pallas.1} parent=11 // pred_check
        %p110 = pneg %p67
      $region14: #{conv2d_pallas.1} parent=11 // pred_check_branch
        %112 = sbr.rel (%p110) target = $region16
      $region15: #{conv2d_pallas.1} parent=11 // pred_region
        _
      $region16: #{conv2d_pallas.1} parent=11 // pred_fallthru
        _
    $region12: #{conv2d_pallas.1} parent=5 // pred_fallthru
      _
    %p113 = scmp.lt.s32.totalorder %s8, 2
    // Predicated region
    $region17: #{conv2d_pallas.1} parent=5 // pred_check
      %p114 = pneg %p113
    $region18: #{conv2d_pallas.1} parent=5 // pred_check_branch
      %116 = sbr.rel (%p114) target = $region20
    $region19: #{conv2d_pallas.1} parent=5 // pred_region
      // Predicated region
      $region21: #{conv2d_pallas.1} parent=19 // pred_check
        %p117 = pneg %p40
      $region22: #{conv2d_pallas.1} parent=19 // pred_check_branch
        %119 = sbr.rel (%p117) target = $region24
      $region23: #{conv2d_pallas.1} parent=19 // pred_region
        %p120 = scmp.lt.s32.totalorder %s15, 1
        %s121 = scalar_select %p120, %s15, 1
        %s122 = smul.addr %s121, 72
        %s123 = smul.addr %s122, 8
        %s124 = scalar_lea.vmem %s0, %s123
      $region24: #{conv2d_pallas.1} parent=19 // pred_fallthru
        _
    $region20: #{conv2d_pallas.1} parent=5 // pred_fallthru
      _
    %p125 = scmp.le.s32.totalorder 1, %s8
    %p126 = scmp.lt.s32.totalorder %s8, 3
    %p127 = pnand %p125, %p126
    %p128 = pneg %p127
    // Predicated region
    $region25: #{conv2d_pallas.1} parent=5 // pred_check
      _
    $region26: #{conv2d_pallas.1} parent=5 // pred_check_branch
      %130 = sbr.rel (%p127) target = $region28
    $region27: #{conv2d_pallas.1} parent=5 // pred_region
      %s131 = ssub.s32 %s8, 1
      %p132 = scmp.lt.s32.totalorder %s17, 1
      %s133 = scalar_select %p132, %s17, 1
      %s134 = smul.addr %s133, 72
      %s135 = smul.addr %s134, 8
      %s136 = scalar_lea.vmem %s0, %s135
      %p137 = pneg %p46
      %p138 = pneg %p43
      %p139 = pneg %p67
      %p140 = pneg %p64
      %p141 = pneg %p95
      %p142 = pneg %p92
      %s143 = smul.u32 8, %s18
      %p144 = scmp.lt.s32.totalorder %s17, 1
      %s145 = scalar_select %p144, %s17, 1
      %p146 = scmp.lt.s32.totalorder %s143, 7
      %s147 = scalar_select %p146, %s143, 7
      %s148 = smul.addr %s145, 8
      %s149 = sadd.s32 %s147, %s148
      %s150 = smul.addr %s149, 8
      %s151 = scalar_lea.vmem %s2, %s150
      %p152 = scmp.lt.s32.totalorder %s17, 1
      %s153 = scalar_select %p152, %s17, 1
      %s154 = smul.addr %s153, 72
      %s155 = smul.addr %s154, 8
      %s156 = scalar_lea.vmem %s0, %s155
      %s157 = smul.u32 8, %s18
      %p158 = scmp.lt.s32.totalorder %s17, 1
      %s159 = scalar_select %p158, %s17, 1
      %p160 = scmp.lt.s32.totalorder %s157, 7
      %s161 = scalar_select %p160, %s157, 7
      %s162 = smul.addr %s159, 8
      %s163 = sadd.s32 %s161, %s162
      %s164 = smul.addr %s163, 8
      %s165 = scalar_lea.vmem %s2, %s164
      %s166 = smul.u32 8, %s18
      %s167 = smul.u32 %s18, 8
      %s168 = smul.u32 %s167, 16
      %s169 = scalar_lea.vmem %s156, %s168
      %v170 = vld [vmem:[%s169] sm:$0xff]
      %v171 = vld [vmem:[%s169 + $0x10] sm:$0xff]
      %v172 = vld [vmem:[%s169 + $0x20] sm:$0xff]
      %v173 = vld [vmem:[%s169 + $0x30] sm:$0xff]
      %v174 = vld [vmem:[%s169 + $0x40] sm:$0xff]
      %v175 = vld [vmem:[%s169 + $0x50] sm:$0xff]
      %v176 = vld [vmem:[%s169 + $0x60] sm:$0xff]
      %v177 = vld [vmem:[%s169 + $0x70] sm:$0xff]
      %s178 = sadd.s32 %s168, 144
      %s179 = scalar_lea.vmem %s156, %s178
      %v180 = vld [vmem:[%s179] sm:$0xff]
      %v181 = vld [vmem:[%s179 + $0x10] sm:$0xff]
      %v182 = vld [vmem:[%s179 + $0x20] sm:$0xff]
      %v183 = vld [vmem:[%s179 + $0x30] sm:$0xff]
      %v184 = vld [vmem:[%s179 + $0x40] sm:$0xff]
      %v185 = vld [vmem:[%s179 + $0x50] sm:$0xff]
      %v186 = vld [vmem:[%s179 + $0x60] sm:$0xff]
      %v187 = vld [vmem:[%s179 + $0x70] sm:$0xff]
      %v188 = vld [vmem:[%s169 + $0x1] sm:$0xff]
      %v189 = vld [vmem:[%s169 + $0x11] sm:$0xff]
      %v190 = vld [vmem:[%s169 + $0x21] sm:$0xff]
      %v191 = vld [vmem:[%s169 + $0x31] sm:$0xff]
      %v192 = vld [vmem:[%s169 + $0x41] sm:$0xff]
      %v193 = vld [vmem:[%s169 + $0x51] sm:$0xff]
      %v194 = vld [vmem:[%s169 + $0x61] sm:$0xff]
      %v195 = vld [vmem:[%s169 + $0x71] sm:$0xff]
      %s196 = sadd.s32 %s168, 288
      %s197 = scalar_lea.vmem %s156, %s196
      %v198 = vld [vmem:[%s197] sm:$0xff]
      %v199 = vld [vmem:[%s197 + $0x10] sm:$0xff]
      %v200 = vld [vmem:[%s197 + $0x20] sm:$0xff]
      %v201 = vld [vmem:[%s197 + $0x30] sm:$0xff]
      %v202 = vld [vmem:[%s197 + $0x40] sm:$0xff]
      %v203 = vld [vmem:[%s197 + $0x50] sm:$0xff]
      %v204 = vld [vmem:[%s197 + $0x60] sm:$0xff]
      %v205 = vld [vmem:[%s197 + $0x70] sm:$0xff]
      %s206 = sadd.s32 %s168, 432
      %s207 = scalar_lea.vmem %s156, %s206
      %v208 = vld [vmem:[%s207] sm:$0xff]
      %v209 = vld [vmem:[%s207 + $0x10] sm:$0xff]
      %v210 = vld [vmem:[%s207 + $0x20] sm:$0xff]
      %v211 = vld [vmem:[%s207 + $0x30] sm:$0xff]
      %v212 = vld [vmem:[%s207 + $0x40] sm:$0xff]
      %v213 = vld [vmem:[%s207 + $0x50] sm:$0xff]
      %v214 = vld [vmem:[%s207 + $0x60] sm:$0xff]
      %v215 = vld [vmem:[%s207 + $0x70] sm:$0xff]
      %v216 = vld [vmem:[%s197 + $0x1] sm:$0xff]
      %v217 = vld [vmem:[%s197 + $0x11] sm:$0xff]
      %v218 = vld [vmem:[%s197 + $0x21] sm:$0xff]
      %v219 = vld [vmem:[%s197 + $0x31] sm:$0xff]
      %v220 = vld [vmem:[%s197 + $0x41] sm:$0xff]
      %v221 = vld [vmem:[%s197 + $0x51] sm:$0xff]
      %v222 = vld [vmem:[%s197 + $0x61] sm:$0xff]
      %v223 = vld [vmem:[%s197 + $0x71] sm:$0xff]
      %s224 = sadd.s32 %s167, 1
      %s225 = smul.u32 %s224, 16
      %s226 = scalar_lea.vmem %s156, %s225
      %v227 = vld [vmem:[%s226] sm:$0xff]
      %v228 = vld [vmem:[%s226 + $0x10] sm:$0xff]
      %v229 = vld [vmem:[%s226 + $0x20] sm:$0xff]
      %v230 = vld [vmem:[%s226 + $0x30] sm:$0xff]
      %v231 = vld [vmem:[%s226 + $0x40] sm:$0xff]
      %v232 = vld [vmem:[%s226 + $0x50] sm:$0xff]
      %v233 = vld [vmem:[%s226 + $0x60] sm:$0xff]
      %v234 = vld [vmem:[%s226 + $0x70] sm:$0xff]
      %s235 = sadd.s32 %s225, 144
      %s236 = scalar_lea.vmem %s156, %s235
      %v237 = vld [vmem:[%s236] sm:$0xff]
      %v238 = vld [vmem:[%s236 + $0x10] sm:$0xff]
      %v239 = vld [vmem:[%s236 + $0x20] sm:$0xff]
      %v240 = vld [vmem:[%s236 + $0x30] sm:$0xff]
      %v241 = vld [vmem:[%s236 + $0x40] sm:$0xff]
      %v242 = vld [vmem:[%s236 + $0x50] sm:$0xff]
      %v243 = vld [vmem:[%s236 + $0x60] sm:$0xff]
      %v244 = vld [vmem:[%s236 + $0x70] sm:$0xff]
      %v245 = vld [vmem:[%s226 + $0x1] sm:$0xff]
      %v246 = vld [vmem:[%s226 + $0x11] sm:$0xff]
      %v247 = vld [vmem:[%s226 + $0x21] sm:$0xff]
      %v248 = vld [vmem:[%s226 + $0x31] sm:$0xff]
      %v249 = vld [vmem:[%s226 + $0x41] sm:$0xff]
      %v250 = vld [vmem:[%s226 + $0x51] sm:$0xff]
      %v251 = vld [vmem:[%s226 + $0x61] sm:$0xff]
      %v252 = vld [vmem:[%s226 + $0x71] sm:$0xff]
      %261 = vrot.lane.b32.xlu0 %v180, 4
      %v262 = vpop.permute.xlu0 %261
      %263 = vrot.lane.b32.xlu0 %v181, 4
      %v264 = vpop.permute.xlu0 %263
      %265 = vrot.lane.b32.xlu0 %v182, 4
      %v266 = vpop.permute.xlu0 %265
      %267 = vrot.lane.b32.xlu0 %v183, 4
      %v268 = vpop.permute.xlu0 %267
      %269 = vrot.lane.b32.xlu0 %v184, 4
      %v270 = vpop.permute.xlu0 %269
      %271 = vrot.lane.b32.xlu0 %v185, 4
      %v272 = vpop.permute.xlu0 %271
      %273 = vrot.lane.b32.xlu0 %v186, 4
      %v274 = vpop.permute.xlu0 %273
      %275 = vrot.lane.b32.xlu0 %v187, 4
      %v276 = vpop.permute.xlu0 %275
      %293 = vrot.lane.b32.xlu0 %v188, 8
      %v294 = vpop.permute.xlu0 %293
      %295 = vrot.lane.b32.xlu0 %v189, 8
      %v296 = vpop.permute.xlu0 %295
      %297 = vrot.lane.b32.xlu0 %v190, 8
      %v298 = vpop.permute.xlu0 %297
      %299 = vrot.lane.b32.xlu0 %v191, 8
      %v300 = vpop.permute.xlu0 %299
      %301 = vrot.lane.b32.xlu0 %v192, 8
      %v302 = vpop.permute.xlu0 %301
      %303 = vrot.lane.b32.xlu0 %v193, 8
      %v304 = vpop.permute.xlu0 %303
      %305 = vrot.lane.b32.xlu0 %v194, 8
      %v306 = vpop.permute.xlu0 %305
      %307 = vrot.lane.b32.xlu0 %v195, 8
      %v308 = vpop.permute.xlu0 %307
      %325 = vrot.lane.b32.xlu0 %v198, 12
      %v326 = vpop.permute.xlu0 %325
      %327 = vrot.lane.b32.xlu0 %v199, 12
      %v328 = vpop.permute.xlu0 %327
      %329 = vrot.lane.b32.xlu0 %v200, 12
      %v330 = vpop.permute.xlu0 %329
      %331 = vrot.lane.b32.xlu0 %v201, 12
      %v332 = vpop.permute.xlu0 %331
      %333 = vrot.lane.b32.xlu0 %v202, 12
      %v334 = vpop.permute.xlu0 %333
      %335 = vrot.lane.b32.xlu0 %v203, 12
      %v336 = vpop.permute.xlu0 %335
      %337 = vrot.lane.b32.xlu0 %v204, 12
      %v338 = vpop.permute.xlu0 %337
      %339 = vrot.lane.b32.xlu0 %v205, 12
      %v340 = vpop.permute.xlu0 %339
      %357 = vrot.lane.b32.xlu0 %v208, 16
      %v358 = vpop.permute.xlu0 %357
      %359 = vrot.lane.b32.xlu0 %v209, 16
      %v360 = vpop.permute.xlu0 %359
      %361 = vrot.lane.b32.xlu0 %v210, 16
      %v362 = vpop.permute.xlu0 %361
      %363 = vrot.lane.b32.xlu0 %v211, 16
      %v364 = vpop.permute.xlu0 %363
      %365 = vrot.lane.b32.xlu0 %v212, 16
      %v366 = vpop.permute.xlu0 %365
      %367 = vrot.lane.b32.xlu0 %v213, 16
      %v368 = vpop.permute.xlu0 %367
      %369 = vrot.lane.b32.xlu0 %v214, 16
      %v370 = vpop.permute.xlu0 %369
      %371 = vrot.lane.b32.xlu0 %v215, 16
      %v372 = vpop.permute.xlu0 %371
      %389 = vrot.lane.b32.xlu0 %v216, 20
      %v390 = vpop.permute.xlu0 %389
      %391 = vrot.lane.b32.xlu0 %v217, 20
      %v392 = vpop.permute.xlu0 %391
      %393 = vrot.lane.b32.xlu0 %v218, 20
      %v394 = vpop.permute.xlu0 %393
      %395 = vrot.lane.b32.xlu0 %v219, 20
      %v396 = vpop.permute.xlu0 %395
      %397 = vrot.lane.b32.xlu0 %v220, 20
      %v398 = vpop.permute.xlu0 %397
      %399 = vrot.lane.b32.xlu0 %v221, 20
      %v400 = vpop.permute.xlu0 %399
      %401 = vrot.lane.b32.xlu0 %v222, 20
      %v402 = vpop.permute.xlu0 %401
      %403 = vrot.lane.b32.xlu0 %v223, 20
      %v404 = vpop.permute.xlu0 %403
      %421 = vrot.lane.b32.xlu0 %v227, 24
      %v422 = vpop.permute.xlu0 %421
      %423 = vrot.lane.b32.xlu0 %v228, 24
      %v424 = vpop.permute.xlu0 %423
      %425 = vrot.lane.b32.xlu0 %v229, 24
      %v426 = vpop.permute.xlu0 %425
      %427 = vrot.lane.b32.xlu0 %v230, 24
      %v428 = vpop.permute.xlu0 %427
      %429 = vrot.lane.b32.xlu0 %v231, 24
      %v430 = vpop.permute.xlu0 %429
      %431 = vrot.lane.b32.xlu0 %v232, 24
      %v432 = vpop.permute.xlu0 %431
      %433 = vrot.lane.b32.xlu0 %v233, 24
      %v434 = vpop.permute.xlu0 %433
      %435 = vrot.lane.b32.xlu0 %v234, 24
      %v436 = vpop.permute.xlu0 %435
      %453 = vrot.lane.b32.xlu0 %v237, 28
      %v454 = vpop.permute.xlu0 %453
      %455 = vrot.lane.b32.xlu0 %v238, 28
      %v456 = vpop.permute.xlu0 %455
      %457 = vrot.lane.b32.xlu0 %v239, 28
      %v458 = vpop.permute.xlu0 %457
      %459 = vrot.lane.b32.xlu0 %v240, 28
      %v460 = vpop.permute.xlu0 %459
      %461 = vrot.lane.b32.xlu0 %v241, 28
      %v462 = vpop.permute.xlu0 %461
      %463 = vrot.lane.b32.xlu0 %v242, 28
      %v464 = vpop.permute.xlu0 %463
      %465 = vrot.lane.b32.xlu0 %v243, 28
      %v466 = vpop.permute.xlu0 %465
      %467 = vrot.lane.b32.xlu0 %v244, 28
      %v468 = vpop.permute.xlu0 %467
      %485 = vrot.lane.b32.xlu0 %v245, 32
      %v486 = vpop.permute.xlu0 %485
      %487 = vrot.lane.b32.xlu0 %v246, 32
      %v488 = vpop.permute.xlu0 %487
      %489 = vrot.lane.b32.xlu0 %v247, 32
      %v490 = vpop.permute.xlu0 %489
      %491 = vrot.lane.b32.xlu0 %v248, 32
      %v492 = vpop.permute.xlu0 %491
      %493 = vrot.lane.b32.xlu0 %v249, 32
      %v494 = vpop.permute.xlu0 %493
      %495 = vrot.lane.b32.xlu0 %v250, 32
      %v496 = vpop.permute.xlu0 %495
      %497 = vrot.lane.b32.xlu0 %v251, 32
      %v498 = vpop.permute.xlu0 %497
      %499 = vrot.lane.b32.xlu0 %v252, 32
      %v500 = vpop.permute.xlu0 %499
      %vm509 = vcmask 31744
      %v510 = vsel %vm509, %v170, %v262
      %v511 = vsel %vm509, %v171, %v264
      %v512 = vsel %vm509, %v172, %v266
      %v513 = vsel %vm509, %v173, %v268
      %v514 = vsel %vm509, %v174, %v270
      %v515 = vsel %vm509, %v175, %v272
      %v516 = vsel %vm509, %v176, %v274
      %v517 = vsel %vm509, %v177, %v276
      %vm518 = vcmask 64512
      %v519 = vsel %vm518, %v510, %v294
      %v520 = vsel %vm518, %v511, %v296
      %v521 = vsel %vm518, %v512, %v298
      %v522 = vsel %vm518, %v513, %v300
      %v523 = vsel %vm518, %v514, %v302
      %v524 = vsel %vm518, %v515, %v304
      %v525 = vsel %vm518, %v516, %v306
      %v526 = vsel %vm518, %v517, %v308
      %vm527 = vcmask 97280
      %v528 = vsel %vm527, %v519, %v326
      %v529 = vsel %vm527, %v520, %v328
      %v530 = vsel %vm527, %v521, %v330
      %v531 = vsel %vm527, %v522, %v332
      %v532 = vsel %vm527, %v523, %v334
      %v533 = vsel %vm527, %v524, %v336
      %v534 = vsel %vm527, %v525, %v338
      %v535 = vsel %vm527, %v526, %v340
      %vm536 = vcmask 130048
      %v537 = vsel %vm536, %v528, %v358
      %v538 = vsel %vm536, %v529, %v360
      %v539 = vsel %vm536, %v530, %v362
      %v540 = vsel %vm536, %v531, %v364
      %v541 = vsel %vm536, %v532, %v366
      %v542 = vsel %vm536, %v533, %v368
      %v543 = vsel %vm536, %v534, %v370
      %v544 = vsel %vm536, %v535, %v372
      %vm545 = vcmask 162816
      %v546 = vsel %vm545, %v537, %v390
      %v547 = vsel %vm545, %v538, %v392
      %v548 = vsel %vm545, %v539, %v394
      %v549 = vsel %vm545, %v540, %v396
      %v550 = vsel %vm545, %v541, %v398
      %v551 = vsel %vm545, %v542, %v400
      %v552 = vsel %vm545, %v543, %v402
      %v553 = vsel %vm545, %v544, %v404
      %vm554 = vcmask 195584
      %v555 = vsel %vm554, %v546, %v422
      %v556 = vsel %vm554, %v547, %v424
      %v557 = vsel %vm554, %v548, %v426
      %v558 = vsel %vm554, %v549, %v428
      %v559 = vsel %vm554, %v550, %v430
      %v560 = vsel %vm554, %v551, %v432
      %v561 = vsel %vm554, %v552, %v434
      %v562 = vsel %vm554, %v553, %v436
      %vm563 = vcmask 228352
      %v564 = vsel %vm563, %v555, %v454
      %v565 = vsel %vm563, %v556, %v456
      %v566 = vsel %vm563, %v557, %v458
      %v567 = vsel %vm563, %v558, %v460
      %v568 = vsel %vm563, %v559, %v462
      %v569 = vsel %vm563, %v560, %v464
      %v570 = vsel %vm563, %v561, %v466
      %v571 = vsel %vm563, %v562, %v468
      %vm572 = vcmask 261120
      %v573 = vsel %vm572, %v564, %v486
      %v574 = vsel %vm572, %v565, %v488
      %v575 = vsel %vm572, %v566, %v490
      %v576 = vsel %vm572, %v567, %v492
      %v577 = vsel %vm572, %v568, %v494
      %v578 = vsel %vm572, %v569, %v496
      %v579 = vsel %vm572, %v570, %v498
      %v580 = vsel %vm572, %v571, %v500
      %v581 = vld [vmem:[%s1] sm:$0xff]
      %v582 = vld [vmem:[%s1 + $0x8] sm:$0xff]
      %v583 = vld [vmem:[%s1 + $0x10] sm:$0xff]
      %v584 = vld [vmem:[%s1 + $0x18] sm:$0xff]
      %v585 = vld [vmem:[%s1 + $0x20] sm:$0xf]
      %vm586 = vcmask 293888
      %v588 = vsel %vm586, %v573, 0
      %v591 = vsel %vm586, %v574, 0
      %v594 = vsel %vm586, %v575, 0
      %v597 = vsel %vm586, %v576, 0
      %v600 = vsel %vm586, %v577, 0
      %v603 = vsel %vm586, %v578, 0
      %v606 = vsel %vm586, %v579, 0
      %v609 = vsel %vm586, %v580, 0
      %vm611 = vcmask 1043456
      %v613 = vsel %vm611, %v585, 0
      %615 = vmatpush.msra.mxu0 0.0
      %616 = vmatpush.msra.mxu0 0.0
      %617 = vmatpush.msra.mxu0 0.0
      %618 = vmatpush.msra.mxu0 0.0
      %619 = vmatpush.msra.mxu0 0.0
      %620 = vmatpush.msra.mxu0 0.0
      %621 = vmatpush.msra.mxu0 0.0
      %622 = vmatpush.msra.mxu0 0.0
      %623 = vmatpush.msra.mxu0 0.0
      %624 = vmatpush.msra.mxu0 0.0
      %625 = vmatpush.msra.mxu0 0.0
      %626 = vmatpush.msra.mxu0 %v613
      %627 = vmatpush.msra.mxu0 %v584
      %628 = vmatpush.msra.mxu0 %v583
      %629 = vmatpush.msra.mxu0 %v582
      %630 = vmatpush.msra.mxu0 %v581
      %631 = vmatmul.f32.gmra.mxu0 %v588
      %v632 = vpop.f32.mrf.mxu0
      %v633 = vadd.f32 0.0, %v632
      %634 = vmatmul.f32.gmra.mxu0 %v591
      %v635 = vpop.f32.mrf.mxu0
      %v636 = vadd.f32 0.0, %v635
      %637 = vmatmul.f32.gmra.mxu0 %v594
      %v638 = vpop.f32.mrf.mxu0
      %v639 = vadd.f32 0.0, %v638
      %640 = vmatmul.f32.gmra.mxu0 %v597
      %v641 = vpop.f32.mrf.mxu0
      %v642 = vadd.f32 0.0, %v641
      %643 = vmatmul.f32.gmra.mxu0 %v600
      %v644 = vpop.f32.mrf.mxu0
      %v645 = vadd.f32 0.0, %v644
      %646 = vmatmul.f32.gmra.mxu0 %v603
      %v647 = vpop.f32.mrf.mxu0
      %v648 = vadd.f32 0.0, %v647
      %649 = vmatmul.f32.gmra.mxu0 %v606
      %v650 = vpop.f32.mrf.mxu0
      %v651 = vadd.f32 0.0, %v650
      %652 = vmatmul.f32.gmra.mxu0 %v609
      %v653 = vpop.f32.mrf.mxu0
      %v654 = vadd.f32 0.0, %v653
      %655 = vdwg.mxu0
      %656 = vst [vmem:[%s165] sm:$0xff] %v633
      %657 = vst [vmem:[%s165 + $0x8] sm:$0xff] %v636
      %658 = vst [vmem:[%s165 + $0x10] sm:$0xff] %v639
      %659 = vst [vmem:[%s165 + $0x18] sm:$0xff] %v642
      %660 = vst [vmem:[%s165 + $0x20] sm:$0xff] %v645
      %661 = vst [vmem:[%s165 + $0x28] sm:$0xff] %v648
      %662 = vst [vmem:[%s165 + $0x30] sm:$0xff] %v651
      %663 = vst [vmem:[%s165 + $0x38] sm:$0xff] %v654
      %s664 = smul.u32 8, %s18
      %p665 = scmp.lt.s32.totalorder %s17, 1
      %s666 = scalar_select %p665, %s17, 1
      %p667 = scmp.lt.s32.totalorder %s664, 7
      %s668 = scalar_select %p667, %s664, 7
      %s669 = smul.addr %s666, 8
      %s670 = sadd.s32 %s668, %s669
      %s671 = smul.addr %s670, 8
      %s672 = scalar_lea.vmem %s2, %s671
      // Predicated region
      $region29: #{conv2d_pallas.1} parent=27 // pred_check
        %p673 = pneg %p92
      $region30: #{conv2d_pallas.1} parent=27 // pred_check_branch
        %675 = sbr.rel (%p673) target = $region32
      $region31: #{conv2d_pallas.1} parent=27 // pred_region
        %s676 = smul.u32 8, %s18
      $region32: #{conv2d_pallas.1} parent=27 // pred_fallthru
        _
    $region28: #{conv2d_pallas.1} parent=5 // pred_fallthru
      _
    %p677 = scmp.le.s32.totalorder 2, %s8
    // Predicated region
    $region33: #{conv2d_pallas.1} parent=5 // pred_check
      %p678 = pneg %p677
    $region34: #{conv2d_pallas.1} parent=5 // pred_check_branch
      %680 = sbr.rel (%p678) target = $region36
    $region35: #{conv2d_pallas.1} parent=5 // pred_region
      %s681 = ssub.s32 %s8, 2
      // Predicated region
      $region37: #{conv2d_pallas.1} parent=35 // pred_check
        %p682 = pneg %p98
      $region38: #{conv2d_pallas.1} parent=35 // pred_check_branch
        %684 = sbr.rel (%p682) target = $region40
      $region39: #{conv2d_pallas.1} parent=35 // pred_region
        %s685 = smul.u32 8, %s20
        %p686 = scmp.lt.s32.totalorder %s19, 1
        %s687 = scalar_select %p686, %s19, 1
        %p688 = scmp.lt.s32.totalorder %s685, 7
        %s689 = scalar_select %p688, %s685, 7
        %s690 = smul.addr %s687, 8
        %s691 = sadd.s32 %s689, %s690
        %s692 = smul.addr %s691, 8
        %s693 = scalar_lea.vmem %s2, %s692
      $region40: #{conv2d_pallas.1} parent=35 // pred_fallthru
        _
    $region36: #{conv2d_pallas.1} parent=5 // pred_fallthru
      _
  $region6: #{conv2d_pallas.1} parent=0 // loop_footer
    %s12 = sadd.s32 1, %s8
  $region7: #{conv2d_pallas.1} parent=0 // loop_footer_branch
    %7 = sbr.rel target = $region3
  $region8: #{conv2d_pallas.1} parent=0 // loop_exit
    _

</llo_original>
